<compile_context>
chip_gen: v7x
topology: tpu7x:2x2x1
jax: 0.10.0
libtpu: 0.0.40
codegen_flags: <defaults>
</compile_context>

<pallas_src>
import jax
import jax.numpy as jnp
from jax.experimental import pallas as pl
from jax.experimental.pallas import tpu as pltpu

LANE = 128
SUBLANE_BF16 = 16


def _round_up(x, m):
    return (x + m - 1) // m * m


def _vmem_limit_bytes():
    """~85% of physical per-TensorCore VMEM, generation-aware."""
    try:
        cap = pltpu.get_tpu_info().vmem_capacity_bytes
    except Exception:
        cap = 128 * 1024 * 1024  # v5e/v6e physical VMEM fallback
    return int(cap * 0.85)


def mlp_kernel(x_ref, *refs):
    """Fused MLP: Linear -> (ReLU -> Linear) * num_layers.

    refs = (w0, b0, w1, b1, ..., wL, bL, out_ref)
    ReLU is applied between consecutive Linear layers (not after the last one),
    matching the PyTorch Sequential built in MLP.__init__.
    x and W are bf16 (MXU-native operands); accumulation, bias-add and ReLU are
    f32; the carried activation between layers is downcast to bf16.
    """
    *wb_refs, o_ref = refs
    n_linear = len(wb_refs) // 2

    h = x_ref[...]                            # bf16 (tile_b, d_in_p)
    for layer in range(n_linear):
        w = wb_refs[2 * layer][...]           # bf16 (d_in_p, d_out_p)
        b = wb_refs[2 * layer + 1][...]       # f32  (1, d_out_p)
        # bf16 operands into the MXU, f32 accumulate, f32 bias-add.
        acc = jnp.dot(h, w, preferred_element_type=jnp.float32) + b
        if layer < n_linear - 1:
            acc = jnp.maximum(acc, 0.0)       # ReLU in f32 (safe on v5e VPU)
            h = acc.astype(jnp.bfloat16)      # carry bf16 between layers
        else:
            h = acc                           # last layer stays f32
    # Dropout: eval-mode identity.
    o_ref[...] = h.astype(o_ref.dtype)


def mlp_forward(x, params, *, tile_b=256):
    """Run the fused MLP kernel.

    x:      (B, input_size) float32
    params: list of (W, b) with W: (d_in, d_out) f32, b: (1, d_out) f32
    """
    B, d_in = x.shape
    d_out = params[-1][0].shape[1]

    # Keep >= 2 grid steps when the batch allows it so the parallel batch axis
    # can be sharded across both TensorCores on v7x; tile must stay a multiple
    # of 16 (bf16 sublane packing).
    tile_b = max(SUBLANE_BF16,
                 min(tile_b, _round_up((B + 1) // 2, SUBLANE_BF16)))

    d_in_p = _round_up(d_in, LANE)
    B_p = _round_up(B, tile_b)

    # Input: cast to bf16 (halves DMA traffic), pad only if needed.
    x_bf16 = x.astype(jnp.bfloat16)
    if (B_p, d_in_p) != (B, d_in):
        x_p = jnp.pad(x_bf16, ((0, B_p - B), (0, d_in_p - d_in)))
    else:
        x_p = x_bf16

    # Weights/biases: lane-align (pad with zeros, mathematically inert since the
    # padded activation columns stay exactly zero through every layer), cast
    # weights to bf16. Skip the pad when already aligned.
    padded = []
    prev = d_in_p
    for (w, b) in params:
        di, do = w.shape
        do_p = _round_up(do, LANE)
        w_bf16 = w.astype(jnp.bfloat16)
        if (prev, do_p) != (di, do):
            w_p = jnp.pad(w_bf16, ((0, prev - di), (0, do_p - do)))
        else:
            w_p = w_bf16
        if do_p != do:
            b_p = jnp.pad(b, ((0, 0), (0, do_p - do)))
        else:
            b_p = b
        padded.append((w_p, b_p))
        prev = do_p
    d_out_p = prev

    # BlockSpecs: activations tiled over batch; weights/biases loaded whole with
    # a constant index_map and a single buffer (grid-invariant -> no need to
    # double-buffer, halves their VMEM footprint).
    in_specs = [pl.BlockSpec((tile_b, d_in_p), lambda i: (i, 0))]
    flat_params = []
    for (w_p, b_p) in padded:
        in_specs.append(pl.BlockSpec(w_p.shape, lambda i: (0, 0),
                                     pipeline_mode=pl.Buffered(1)))
        in_specs.append(pl.BlockSpec(b_p.shape, lambda i: (0, 0),
                                     pipeline_mode=pl.Buffered(1)))
        flat_params.extend([w_p, b_p])
    out_spec = pl.BlockSpec((tile_b, d_out_p), lambda i: (i, 0))

    # Advisory cost estimate for XLA scheduling around the fused call.
    flops = 2 * B_p * sum(w_p.shape[0] * w_p.shape[1] for (w_p, _) in padded)
    bytes_accessed = (
        x_p.size * 2
        + sum(w_p.size * 2 + b_p.size * 4 for (w_p, b_p) in padded)
        + B_p * d_out_p * 4)
    cost = pl.CostEstimate(flops=flops, transcendentals=0,
                           bytes_accessed=bytes_accessed)

    out_p = pl.pallas_call(
        mlp_kernel,
        out_shape=jax.ShapeDtypeStruct((B_p, d_out_p), jnp.float32),
        grid=(B_p // tile_b,),
        in_specs=in_specs,
        out_specs=out_spec,
        compiler_params=pltpu.CompilerParams(
            dimension_semantics=("parallel",),
            vmem_limit_bytes=_vmem_limit_bytes(),
        ),
        cost_estimate=cost,
    )(x_p, *flat_params)

    # Strip batch / lane padding.
    return out_p[:B, :d_out]


def init_mlp_params(key, num_layers, input_size, hidden_size, output_size):
    """Deterministic init matching the layer shapes of the PyTorch module.

    Layer stack: Linear(in, h), [ReLU, Linear(h, h)] * (num_layers-1),
                 ReLU, Linear(h, out).
    PyTorch-style uniform(-1/sqrt(fan_in), 1/sqrt(fan_in)).
    """
    assert num_layers > 0
    dims = [(input_size, hidden_size)]
    for i in range(num_layers):
        if i == num_layers - 1:
            dims.append((hidden_size, output_size))
        else:
            dims.append((hidden_size, hidden_size))

    params = []
    for (d_in, d_out) in dims:
        key, kw, kb = jax.random.split(key, 3)
        bound = 1.0 / jnp.sqrt(d_in)
        w = jax.random.uniform(kw, (d_in, d_out), jnp.float32, -bound, bound)
        b = jax.random.uniform(kb, (1, d_out), jnp.float32, -bound, bound)
        params.append((w, b))
    return params


def mlp_reference(x, params):
    """Plain-JAX f32 reference for correctness check (dropout = identity)."""
    h = x
    for i, (w, b) in enumerate(params):
        h = h @ w + b
        if i < len(params) - 1:
            h = jnp.maximum(h, 0.0)
    return h


if __name__ == "__main__":
    # Small, module-consistent shapes (batch sized so the tile clamp yields a
    # 2-step batch grid: tile_b -> 128, grid=(2,)).
    num_layers = 2
    input_size = 64
    hidden_size = 128
    output_size = 32
    batch = 256

    key = jax.random.PRNGKey(0)
    key, kx = jax.random.split(key)
    x = jax.random.normal(kx, (batch, input_size), jnp.float32)

    params = init_mlp_params(key, num_layers, input_size, hidden_size,
                             output_size)

    out = mlp_forward(x, params, tile_b=256)
    out = jax.block_until_ready(out)

    ref = mlp_reference(x, params)
    assert out.shape == (batch, output_size)
    # bf16 MXU operands / bf16 carried activations vs f32 reference.
    assert jnp.allclose(out, ref, atol=3e-2, rtol=3e-2), (
        f"max abs err {jnp.max(jnp.abs(out - ref))}")

    print("KERNEL_OK")
</pallas_src>

<mosaic_0001>
module attributes {stable_mosaic.version = 11 : i64} {
  func.func @mlp_kernel(%arg0: i32, %arg1: memref<128x128xbf16, #tpu.memory_space<vmem>>, %arg2: memref<128x128xbf16, #tpu.memory_space<vmem>>, %arg3: memref<1x128xf32, #tpu.memory_space<vmem>>, %arg4: memref<128x128xbf16, #tpu.memory_space<vmem>>, %arg5: memref<1x128xf32, #tpu.memory_space<vmem>>, %arg6: memref<128x128xbf16, #tpu.memory_space<vmem>>, %arg7: memref<1x128xf32, #tpu.memory_space<vmem>>, %arg8: memref<128x128xf32, #tpu.memory_space<vmem>>) attributes {dimension_semantics = [#tpu.dimension_semantics<parallel>], iteration_bounds = array<i64: 2>, scalar_prefetch = 0 : i64, scratch_operands = 0 : i64, tpu.core_type = #tpu.core_type<tc>, window_params = [{transform_indices = @transform_0, window_bounds = array<i64: 128, 128>}, {pipeline_mode = #tpu.pipeline_mode<synchronous>, transform_indices = @transform_1, window_bounds = array<i64: 128, 128>}, {pipeline_mode = #tpu.pipeline_mode<synchronous>, transform_indices = @transform_2, window_bounds = array<i64: 1, 128>}, {pipeline_mode = #tpu.pipeline_mode<synchronous>, transform_indices = @transform_3, window_bounds = array<i64: 128, 128>}, {pipeline_mode = #tpu.pipeline_mode<synchronous>, transform_indices = @transform_4, window_bounds = array<i64: 1, 128>}, {pipeline_mode = #tpu.pipeline_mode<synchronous>, transform_indices = @transform_5, window_bounds = array<i64: 128, 128>}, {pipeline_mode = #tpu.pipeline_mode<synchronous>, transform_indices = @transform_6, window_bounds = array<i64: 1, 128>}, {transform_indices = @transform_7, window_bounds = array<i64: 128, 128>}]} {
    %c0 = arith.constant 0 : index
    %c0_0 = arith.constant 0 : index
    %0 = vector.load %arg1[%c0, %c0_0] : memref<128x128xbf16, #tpu.memory_space<vmem>>, vector<128x128xbf16>
    %c0_1 = arith.constant 0 : index
    %c0_2 = arith.constant 0 : index
    %1 = vector.load %arg2[%c0_1, %c0_2] : memref<128x128xbf16, #tpu.memory_space<vmem>>, vector<128x128xbf16>
    %c0_3 = arith.constant 0 : index
    %c0_4 = arith.constant 0 : index
    %2 = vector.load %arg3[%c0_3, %c0_4] : memref<1x128xf32, #tpu.memory_space<vmem>>, vector<1x128xf32>
    %cst = arith.constant dense<0.000000e+00> : vector<128x128xf32>
    %3 = tpu.matmul %0, %1, %cst {dimension_numbers = #tpu.dot_dimension_numbers<[1], [0], [0], [1], [0, 0, 1, 1], [], []>} : vector<128x128xbf16>, vector<128x128xbf16>, vector<128x128xf32> -> vector<128x128xf32>
    %4 = vector.broadcast %2 : vector<1x128xf32> to vector<128x128xf32>
    %5 = arith.addf %3, %4 : vector<128x128xf32>
    %cst_5 = arith.constant 0.000000e+00 : f32
    %6 = vector.broadcast %cst_5 : f32 to vector<128x128xf32>
    %7 = arith.maximumf %5, %6 : vector<128x128xf32>
    %8 = arith.truncf %7 : vector<128x128xf32> to vector<128x128xbf16>
    %c0_6 = arith.constant 0 : index
    %c0_7 = arith.constant 0 : index
    %9 = vector.load %arg4[%c0_6, %c0_7] : memref<128x128xbf16, #tpu.memory_space<vmem>>, vector<128x128xbf16>
    %c0_8 = arith.constant 0 : index
    %c0_9 = arith.constant 0 : index
    %10 = vector.load %arg5[%c0_8, %c0_9] : memref<1x128xf32, #tpu.memory_space<vmem>>, vector<1x128xf32>
    %cst_10 = arith.constant dense<0.000000e+00> : vector<128x128xf32>
    %11 = tpu.matmul %8, %9, %cst_10 {dimension_numbers = #tpu.dot_dimension_numbers<[1], [0], [0], [1], [0, 0, 1, 1], [], []>} : vector<128x128xbf16>, vector<128x128xbf16>, vector<128x128xf32> -> vector<128x128xf32>
    %12 = vector.broadcast %10 : vector<1x128xf32> to vector<128x128xf32>
    %13 = arith.addf %11, %12 : vector<128x128xf32>
    %cst_11 = arith.constant 0.000000e+00 : f32
    %14 = vector.broadcast %cst_11 : f32 to vector<128x128xf32>
    %15 = arith.maximumf %13, %14 : vector<128x128xf32>
    %16 = arith.truncf %15 : vector<128x128xf32> to vector<128x128xbf16>
    %c0_12 = arith.constant 0 : index
    %c0_13 = arith.constant 0 : index
    %17 = vector.load %arg6[%c0_12, %c0_13] : memref<128x128xbf16, #tpu.memory_space<vmem>>, vector<128x128xbf16>
    %c0_14 = arith.constant 0 : index
    %c0_15 = arith.constant 0 : index
    %18 = vector.load %arg7[%c0_14, %c0_15] : memref<1x128xf32, #tpu.memory_space<vmem>>, vector<1x128xf32>
    %cst_16 = arith.constant dense<0.000000e+00> : vector<128x128xf32>
    %19 = tpu.matmul %16, %17, %cst_16 {dimension_numbers = #tpu.dot_dimension_numbers<[1], [0], [0], [1], [0, 0, 1, 1], [], []>} : vector<128x128xbf16>, vector<128x128xbf16>, vector<128x128xf32> -> vector<128x128xf32>
    %20 = vector.broadcast %18 : vector<1x128xf32> to vector<128x128xf32>
    %21 = arith.addf %19, %20 : vector<128x128xf32>
    %c0_17 = arith.constant 0 : index
    %c0_18 = arith.constant 0 : index
    %22 = vector.load %arg8[%c0_17, %c0_18] : memref<128x128xf32, #tpu.memory_space<vmem>>, vector<128x128xf32>
    tpu.vector_store %arg8[%c0_17, %c0_18], %21 {strides = array<i32>} : memref<128x128xf32, #tpu.memory_space<vmem>>, vector<128x128xf32>,
    return
  }
  func.func @transform_0(%arg0: i32) -> (i32, i32) {
    %c0_i32 = arith.constant 0 : i32
    %c0_i32_0 = arith.constant 0 : i32
    return %arg0, %c0_i32 : i32, i32
  }
  func.func @transform_1(%arg0: i32) -> (i32, i32) {
    %c0_i32 = arith.constant 0 : i32
    %c0_i32_0 = arith.constant 0 : i32
    %c0_i32_1 = arith.constant 0 : i32
    return %c0_i32, %c0_i32_0 : i32, i32
  }
  func.func @transform_2(%arg0: i32) -> (i32, i32) {
    %c0_i32 = arith.constant 0 : i32
    %c0_i32_0 = arith.constant 0 : i32
    %c0_i32_1 = arith.constant 0 : i32
    return %c0_i32, %c0_i32_0 : i32, i32
  }
  func.func @transform_3(%arg0: i32) -> (i32, i32) {
    %c0_i32 = arith.constant 0 : i32
    %c0_i32_0 = arith.constant 0 : i32
    %c0_i32_1 = arith.constant 0 : i32
    return %c0_i32, %c0_i32_0 : i32, i32
  }
  func.func @transform_4(%arg0: i32) -> (i32, i32) {
    %c0_i32 = arith.constant 0 : i32
    %c0_i32_0 = arith.constant 0 : i32
    %c0_i32_1 = arith.constant 0 : i32
    return %c0_i32, %c0_i32_0 : i32, i32
  }
  func.func @transform_5(%arg0: i32) -> (i32, i32) {
    %c0_i32 = arith.constant 0 : i32
    %c0_i32_0 = arith.constant 0 : i32
    %c0_i32_1 = arith.constant 0 : i32
    return %c0_i32, %c0_i32_0 : i32, i32
  }
  func.func @transform_6(%arg0: i32) -> (i32, i32) {
    %c0_i32 = arith.constant 0 : i32
    %c0_i32_0 = arith.constant 0 : i32
    %c0_i32_1 = arith.constant 0 : i32
    return %c0_i32, %c0_i32_0 : i32, i32
  }
  func.func @transform_7(%arg0: i32) -> (i32, i32) {
    %c0_i32 = arith.constant 0 : i32
    %c0_i32_0 = arith.constant 0 : i32
    return %arg0, %c0_i32 : i32, i32
  }
}

</mosaic_0001>

<llo_original>
// kernel: tpu_custom_call.1
$region0: #{tpu_custom_call.1}
  #allocation0 [shape = 'u32[]', space=smem, size = 0x4, offset = 0x4, fixed_abs, tag = 'smem constant byte address 0x4 - core index']
  #allocation1 [shape = 'u32[144,128]{1,0:T(1,128)}', space=vmem, size = 0x12000, scoped, tag = 'internal scratch']
  %s0 = inlined_call_operand.hbm [shape: bf16[256,128], index: 0, kind: input, shape index: {}]
  %s1 = inlined_call_operand.hbm [shape: bf16[128,128], index: 1, kind: input, shape index: {}]
  %s2 = inlined_call_operand.hbm [shape: f32[1,128], index: 2, kind: input, shape index: {}]
  %s3 = inlined_call_operand.hbm [shape: bf16[128,128], index: 3, kind: input, shape index: {}]
  %s4 = inlined_call_operand.hbm [shape: f32[1,128], index: 4, kind: input, shape index: {}]
  %s5 = inlined_call_operand.hbm [shape: bf16[128,128], index: 5, kind: input, shape index: {}]
  %s6 = inlined_call_operand.hbm [shape: f32[1,128], index: 6, kind: input, shape index: {}]
  %s7 = inlined_call_operand.hbm [shape: f32[256,128], index: 7, kind: output, shape index: {}]
  %s8 = sld [smem:[#allocation0]]
  $region89: #{tpu_custom_call.1} parent=0
    _
  %s10 = ssub.s32 1, %s8
  %s11 = scalar_select 0, %s10, %s8
  $region1: #{tpu_custom_call.1} parent=0
    #allocation2 [shape = 'u8[65536]{0}', space=vmem, size = 0x10000, scoped, tag = 'input window, operand 0']
    #allocation3 [shape = 's32[2]{0}', space=sflag, size = 0x8, scoped, tag = 'scoped memory for tpu_custom_call.1']
    #allocation4 [shape = 's32[2]{0}', space=sflag, size = 0x8, scoped, tag = 'scoped memory for tpu_custom_call.1']
    #allocation5 [shape = 'u8[32768]{0}', space=vmem, size = 0x8000, scoped, tag = 'input window, operand 1, single buffered']
    #allocation6 [shape = 's32[1]{0}', space=sflag, size = 0x4, scoped, tag = 'scoped memory for tpu_custom_call.1']
    #allocation7 [shape = 'u8[512]{0}', space=vmem, size = 0x400, scoped, tag = 'input window, operand 2, single buffered']
    #allocation8 [shape = 'u8[32768]{0}', space=vmem, size = 0x8000, scoped, tag = 'input window, operand 3, single buffered']
    #allocation9 [shape = 's32[1]{0}', space=sflag, size = 0x4, scoped, tag = 'scoped memory for tpu_custom_call.1']
    #allocation10 [shape = 'u8[512]{0}', space=vmem, size = 0x400, scoped, tag = 'input window, operand 4, single buffered']
    #allocation11 [shape = 'u8[32768]{0}', space=vmem, size = 0x8000, scoped, tag = 'input window, operand 5, single buffered']
    #allocation12 [shape = 's32[1]{0}', space=sflag, size = 0x4, scoped, tag = 'scoped memory for tpu_custom_call.1']
    #allocation13 [shape = 'u8[512]{0}', space=vmem, size = 0x400, scoped, tag = 'input window, operand 6, single buffered']
    #allocation14 [shape = 'u8[131072]{0}', space=vmem, size = 0x20000, scoped, tag = 'output window, operand 0']
    %12 = vsyncpa [#allocation3], 0
    %s13 = scalar_lea.sflag [#allocation3], 1
    %14 = vsyncpa %s13, 0
    %15 = vsyncpa [#allocation6], 0
    %16 = vsyncpa [#allocation9], 0
    %17 = vsyncpa [#allocation12], 0
    %18 = vsyncpa [#allocation4], 0
    %s19 = scalar_lea.sflag [#allocation4], 1
    %20 = vsyncpa %s19, 0
    loop: start=0, step=1, limit=4
    $region2: #{tpu_custom_call.1} parent=1 // loop_pre_header
      _
    $region3: #{tpu_custom_call.1} parent=1 // loop_header
      %s22 = sphi 0, %s26
      %p23 = scmp.ge.s32.totalorder %s22, 4
      %s32 = sphi 0, %s34
      %s35 = sphi 0, %s32
      %s36 = sphi 0, %s35
      %s52 = sphi 0, %s36
      %s56 = sphi 0, %s56
      %s58 = sphi 0, %s56
      %s59 = sphi 0, %s58
      %s73 = sphi 0, %s59
      %s77 = sphi 0, %s77
      %s79 = sphi 0, %s77
      %s80 = sphi 0, %s79
      %s94 = sphi 0, %s80
      %s98 = sphi 0, %s98
      %s100 = sphi 0, %s98
      %s101 = sphi 0, %s100
      %s115 = sphi 0, %s101
      %s119 = sphi 0, %s119
      %s121 = sphi 0, %s119
      %s122 = sphi 0, %s121
      %s136 = sphi 0, %s122
      %s140 = sphi 0, %s140
      %s142 = sphi 0, %s140
      %s143 = sphi 0, %s142
      %s157 = sphi 0, %s143
      %s161 = sphi 0, %s161
      %s163 = sphi 0, %s161
      %s164 = sphi 0, %s163
      %s178 = sphi 0, %s164
      %s184 = sphi 0, %s186
      %s187 = sphi 0, %s184
      %s188 = sphi 0, %s187
      %s204 = sphi 0, %s188
    $region4: #{tpu_custom_call.1} parent=1 // loop_header_branch
      %25 = sbr.rel (%p23) target = $region8
    $region5: #{tpu_custom_call.1} parent=1 // loop_body
      %s27 = ssub.s32 %s22, 1
      %s28 = ssub.s32 %s22, 2
      %s29 = sadd.s32 %s22, 1
      %s30 = ssub.s32 %s22, %s29
      %p31 = scmp.eq.s32.totalorder %s30, 0
      %s33 = sadd.s32 %s32, 1
      %s34 = scalar_select %p31, %s32, %s33
      %p37 = pneg %p31
      %p38 = scmp.eq.s32.totalorder %s22, 1
      %p39 = por %p37, %p38
      %p40 = scmp.ne.s32.totalorder %s32, %s35
      %p41 = scmp.eq.s32.totalorder %s22, 0
      %p42 = por %p40, %p41
      %p43 = scmp.ne.s32.totalorder %s32, %s35
      %p44 = scmp.eq.s32.totalorder %s27, 1
      %p45 = por %p43, %p44
      %p46 = scmp.ne.s32.totalorder %s35, %s36
      %p47 = scmp.eq.s32.totalorder %s27, 0
      %p48 = por %p46, %p47
      %p49 = scmp.ne.s32.totalorder %s35, %s36
      %p50 = scmp.eq.s32.totalorder %s28, 1
      %p51 = por %p49, %p50
      %p53 = scmp.ne.s32.totalorder %s36, %s52
      %p54 = scmp.eq.s32.totalorder %s28, 0
      %p55 = por %p53, %p54
      %s57 = sadd.s32 %s56, 1
      %p60 = scmp.eq.s32.totalorder %s22, 1
      %p61 = scmp.ne.s32.totalorder %s56, %s58
      %p62 = scmp.eq.s32.totalorder %s22, 0
      %p63 = por %p61, %p62
      %p64 = scmp.ne.s32.totalorder %s56, %s58
      %p65 = scmp.eq.s32.totalorder %s27, 1
      %p66 = por %p64, %p65
      %p67 = scmp.ne.s32.totalorder %s58, %s59
      %p68 = scmp.eq.s32.totalorder %s27, 0
      %p69 = por %p67, %p68
      %p70 = scmp.ne.s32.totalorder %s58, %s59
      %p71 = scmp.eq.s32.totalorder %s28, 1
      %p72 = por %p70, %p71
      %p74 = scmp.ne.s32.totalorder %s59, %s73
      %p75 = scmp.eq.s32.totalorder %s28, 0
      %p76 = por %p74, %p75
      %s78 = sadd.s32 %s77, 1
      %p81 = scmp.eq.s32.totalorder %s22, 1
      %p82 = scmp.ne.s32.totalorder %s77, %s79
      %p83 = scmp.eq.s32.totalorder %s22, 0
      %p84 = por %p82, %p83
      %p85 = scmp.ne.s32.totalorder %s77, %s79
      %p86 = scmp.eq.s32.totalorder %s27, 1
      %p87 = por %p85, %p86
      %p88 = scmp.ne.s32.totalorder %s79, %s80
      %p89 = scmp.eq.s32.totalorder %s27, 0
      %p90 = por %p88, %p89
      %p91 = scmp.ne.s32.totalorder %s79, %s80
      %p92 = scmp.eq.s32.totalorder %s28, 1
      %p93 = por %p91, %p92
      %p95 = scmp.ne.s32.totalorder %s80, %s94
      %p96 = scmp.eq.s32.totalorder %s28, 0
      %p97 = por %p95, %p96
      %s99 = sadd.s32 %s98, 1
      %p102 = scmp.eq.s32.totalorder %s22, 1
      %p103 = scmp.ne.s32.totalorder %s98, %s100
      %p104 = scmp.eq.s32.totalorder %s22, 0
      %p105 = por %p103, %p104
      %p106 = scmp.ne.s32.totalorder %s98, %s100
      %p107 = scmp.eq.s32.totalorder %s27, 1
      %p108 = por %p106, %p107
      %p109 = scmp.ne.s32.totalorder %s100, %s101
      %p110 = scmp.eq.s32.totalorder %s27, 0
      %p111 = por %p109, %p110
      %p112 = scmp.ne.s32.totalorder %s100, %s101
      %p113 = scmp.eq.s32.totalorder %s28, 1
      %p114 = por %p112, %p113
      %p116 = scmp.ne.s32.totalorder %s101, %s115
      %p117 = scmp.eq.s32.totalorder %s28, 0
      %p118 = por %p116, %p117
      %s120 = sadd.s32 %s119, 1
      %p123 = scmp.eq.s32.totalorder %s22, 1
      %p124 = scmp.ne.s32.totalorder %s119, %s121
      %p125 = scmp.eq.s32.totalorder %s22, 0
      %p126 = por %p124, %p125
      %p127 = scmp.ne.s32.totalorder %s119, %s121
      %p128 = scmp.eq.s32.totalorder %s27, 1
      %p129 = por %p127, %p128
      %p130 = scmp.ne.s32.totalorder %s121, %s122
      %p131 = scmp.eq.s32.totalorder %s27, 0
      %p132 = por %p130, %p131
      %p133 = scmp.ne.s32.totalorder %s121, %s122
      %p134 = scmp.eq.s32.totalorder %s28, 1
      %p135 = por %p133, %p134
      %p137 = scmp.ne.s32.totalorder %s122, %s136
      %p138 = scmp.eq.s32.totalorder %s28, 0
      %p139 = por %p137, %p138
      %s141 = sadd.s32 %s140, 1
      %p144 = scmp.eq.s32.totalorder %s22, 1
      %p145 = scmp.ne.s32.totalorder %s140, %s142
      %p146 = scmp.eq.s32.totalorder %s22, 0
      %p147 = por %p145, %p146
      %p148 = scmp.ne.s32.totalorder %s140, %s142
      %p149 = scmp.eq.s32.totalorder %s27, 1
      %p150 = por %p148, %p149
      %p151 = scmp.ne.s32.totalorder %s142, %s143
      %p152 = scmp.eq.s32.totalorder %s27, 0
      %p153 = por %p151, %p152
      %p154 = scmp.ne.s32.totalorder %s142, %s143
      %p155 = scmp.eq.s32.totalorder %s28, 1
      %p156 = por %p154, %p155
      %p158 = scmp.ne.s32.totalorder %s143, %s157
      %p159 = scmp.eq.s32.totalorder %s28, 0
      %p160 = por %p158, %p159
      %s162 = sadd.s32 %s161, 1
      %p165 = scmp.eq.s32.totalorder %s22, 1
      %p166 = scmp.ne.s32.totalorder %s161, %s163
      %p167 = scmp.eq.s32.totalorder %s22, 0
      %p168 = por %p166, %p167
      %p169 = scmp.ne.s32.totalorder %s161, %s163
      %p170 = scmp.eq.s32.totalorder %s27, 1
      %p171 = por %p169, %p170
      %p172 = scmp.ne.s32.totalorder %s163, %s164
      %p173 = scmp.eq.s32.totalorder %s27, 0
      %p174 = por %p172, %p173
      %p175 = scmp.ne.s32.totalorder %s163, %s164
      %p176 = scmp.eq.s32.totalorder %s28, 1
      %p177 = por %p175, %p176
      %p179 = scmp.ne.s32.totalorder %s164, %s178
      %p180 = scmp.eq.s32.totalorder %s28, 0
      %p181 = por %p179, %p180
      %s182 = ssub.s32 %s22, %s29
      %p183 = scmp.eq.s32.totalorder %s182, 0
      %s185 = sadd.s32 %s184, 1
      %s186 = scalar_select %p183, %s184, %s185
      %p189 = pneg %p183
      %p190 = scmp.eq.s32.totalorder %s22, 1
      %p191 = por %p189, %p190
      %p192 = scmp.ne.s32.totalorder %s184, %s187
      %p193 = scmp.eq.s32.totalorder %s22, 0
      %p194 = por %p192, %p193
      %p195 = scmp.ne.s32.totalorder %s184, %s187
      %p196 = scmp.eq.s32.totalorder %s27, 1
      %p197 = por %p195, %p196
      %p198 = scmp.ne.s32.totalorder %s187, %s188
      %p199 = scmp.eq.s32.totalorder %s27, 0
      %p200 = por %p198, %p199
      %p201 = scmp.ne.s32.totalorder %s187, %s188
      %p202 = scmp.eq.s32.totalorder %s28, 1
      %p203 = por %p201, %p202
      %p205 = scmp.ne.s32.totalorder %s188, %s204
      %p206 = scmp.eq.s32.totalorder %s28, 0
      %p207 = por %p205, %p206
      %p208 = scmp.le.s32.totalorder 1, %s22
      %p209 = scmp.lt.s32.totalorder %s22, 3
      %p210 = pnand %p208, %p209
      %p211 = pneg %p210
      // Predicated region
      $region9: #{tpu_custom_call.1} parent=5 // pred_check
        _
      $region10: #{tpu_custom_call.1} parent=5 // pred_check_branch
        %213 = sbr.rel (%p210) target = $region12
      $region11: #{tpu_custom_call.1} parent=5 // pred_region
        %s214 = ssub.s32 %s22, 1
        // Predicated region
        $region13: #{tpu_custom_call.1} parent=11 // pred_check
          %p215 = pneg %p69
        $region14: #{tpu_custom_call.1} parent=11 // pred_check_branch
          %217 = sbr.rel (%p215) target = $region16
        $region15: #{tpu_custom_call.1} parent=11 // pred_region
          %s219 = ssub.s32 1024, 1024
          %220 = vsyncadd [#allocation6], %s219
          %s221 = sshll.u32 [#allocation5], 4
          %s222 = int_to_ptr.vmem [resolvable:$true] %s221
          %227 = dma.hbm_to_vmem [thread:$0]  %s1, 1024, %s222, [#allocation6], 64, 64, 4
        $region16: #{tpu_custom_call.1} parent=11 // pred_fallthru
          _
        // Predicated region
        $region17: #{tpu_custom_call.1} parent=11 // pred_check
          %p228 = pneg %p90
        $region18: #{tpu_custom_call.1} parent=11 // pred_check_branch
          %230 = sbr.rel (%p228) target = $region20
        $region19: #{tpu_custom_call.1} parent=11 // pred_region
          %s232 = ssub.s32 16, 16
          %233 = vsyncadd [#allocation6], %s232
          %s235 = sshll.u32 [#allocation7], 4
          %s236 = int_to_ptr.vmem [resolvable:$true] %s235
          %238 = dma.hbm_to_vmem [thread:$0]  %s2, 16, %s236, [#allocation6]
        $region20: #{tpu_custom_call.1} parent=11 // pred_fallthru
          _
        // Predicated region
        $region21: #{tpu_custom_call.1} parent=11 // pred_check
          %p239 = pneg %p111
        $region22: #{tpu_custom_call.1} parent=11 // pred_check_branch
          %241 = sbr.rel (%p239) target = $region24
        $region23: #{tpu_custom_call.1} parent=11 // pred_region
          %s243 = ssub.s32 1024, 1024
          %244 = vsyncadd [#allocation9], %s243
          %s245 = sshll.u32 [#allocation8], 4
          %s246 = int_to_ptr.vmem [resolvable:$true] %s245
          %251 = dma.hbm_to_vmem [thread:$0]  %s3, 1024, %s246, [#allocation9], 64, 64, 4
        $region24: #{tpu_custom_call.1} parent=11 // pred_fallthru
          _
        // Predicated region
        $region25: #{tpu_custom_call.1} parent=11 // pred_check
          %p252 = pneg %p132
        $region26: #{tpu_custom_call.1} parent=11 // pred_check_branch
          %254 = sbr.rel (%p252) target = $region28
        $region27: #{tpu_custom_call.1} parent=11 // pred_region
          %s256 = ssub.s32 16, 16
          %257 = vsyncadd [#allocation9], %s256
          %s259 = sshll.u32 [#allocation10], 4
          %s260 = int_to_ptr.vmem [resolvable:$true] %s259
          %262 = dma.hbm_to_vmem [thread:$0]  %s4, 16, %s260, [#allocation9]
        $region28: #{tpu_custom_call.1} parent=11 // pred_fallthru
          _
        // Predicated region
        $region29: #{tpu_custom_call.1} parent=11 // pred_check
          %p263 = pneg %p153
        $region30: #{tpu_custom_call.1} parent=11 // pred_check_branch
          %265 = sbr.rel (%p263) target = $region32
        $region31: #{tpu_custom_call.1} parent=11 // pred_region
          %s267 = ssub.s32 1024, 1024
          %268 = vsyncadd [#allocation12], %s267
          %s269 = sshll.u32 [#allocation11], 4
          %s270 = int_to_ptr.vmem [resolvable:$true] %s269
          %275 = dma.hbm_to_vmem [thread:$0]  %s5, 1024, %s270, [#allocation12], 64, 64, 4
        $region32: #{tpu_custom_call.1} parent=11 // pred_fallthru
          _
        // Predicated region
        $region33: #{tpu_custom_call.1} parent=11 // pred_check
          %p276 = pneg %p174
        $region34: #{tpu_custom_call.1} parent=11 // pred_check_branch
          %278 = sbr.rel (%p276) target = $region36
        $region35: #{tpu_custom_call.1} parent=11 // pred_region
          %s280 = ssub.s32 16, 16
          %281 = vsyncadd [#allocation12], %s280
          %s283 = sshll.u32 [#allocation13], 4
          %s284 = int_to_ptr.vmem [resolvable:$true] %s283
          %286 = dma.hbm_to_vmem [thread:$0]  %s6, 16, %s284, [#allocation12]
        $region36: #{tpu_custom_call.1} parent=11 // pred_fallthru
          _
      $region12: #{tpu_custom_call.1} parent=5 // pred_fallthru
        _
      %p287 = scmp.lt.s32.totalorder %s22, 2
      // Predicated region
      $region37: #{tpu_custom_call.1} parent=5 // pred_check
        %p288 = pneg %p287
      $region38: #{tpu_custom_call.1} parent=5 // pred_check_branch
        %290 = sbr.rel (%p288) target = $region40
      $region39: #{tpu_custom_call.1} parent=5 // pred_region
        // Predicated region
        $region41: #{tpu_custom_call.1} parent=39 // pred_check
          %p291 = pneg %p42
        $region42: #{tpu_custom_call.1} parent=39 // pred_check_branch
          %293 = sbr.rel (%p291) target = $region44
        $region43: #{tpu_custom_call.1} parent=39 // pred_region
          %s294 = sand.u32 %s32, 1
          %s295 = scalar_lea.sflag [#allocation3], %s294
          %s296 = sand.u32 %s32, 1
          %s297 = smul.addr %s296, 64
          %s298 = scalar_lea.vmem [#allocation2], %s297
          %s299 = smul.u32 16, %s22
          %s301 = ssub.s32 1024, 1024
          %302 = vsyncadd %s295, %s301
          %s303 = smul.addr %s299, 64
          %s304 = scalar_lea.hbm %s0, %s303
          %s305 = sshll.u32 %s298, 4
          %s306 = int_to_ptr.vmem [resolvable:$true] %s305
          %311 = dma.hbm_to_vmem [thread:$0]  %s304, 1024, %s306, %s295, 64, 64, 4
        $region44: #{tpu_custom_call.1} parent=39 // pred_fallthru
          _
      $region40: #{tpu_custom_call.1} parent=5 // pred_fallthru
        _
      %p312 = scmp.le.s32.totalorder 1, %s22
      %p313 = scmp.lt.s32.totalorder %s22, 3
      %p314 = pnand %p312, %p313
      %p315 = pneg %p314
      // Predicated region
      $region45: #{tpu_custom_call.1} parent=5 // pred_check
        _
      $region46: #{tpu_custom_call.1} parent=5 // pred_check_branch
        %317 = sbr.rel (%p314) target = $region48
      $region47: #{tpu_custom_call.1} parent=5 // pred_region
        %s318 = ssub.s32 %s22, 1
        %s319 = sand.u32 %s35, 1
        %s320 = scalar_lea.sflag [#allocation3], %s319
        %s321 = sand.u32 %s35, 1
        %s322 = smul.addr %s321, 64
        %s323 = scalar_lea.vmem [#allocation2], %s322
        // Predicated region
        $region49: #{tpu_custom_call.1} parent=47 // pred_check
          %p324 = pneg %p48
        $region50: #{tpu_custom_call.1} parent=47 // pred_check_branch
          %326 = sbr.rel (%p324) target = $region52
        $region51: #{tpu_custom_call.1} parent=47 // pred_region
          %327 = dma.done %s320, 1024
        $region52: #{tpu_custom_call.1} parent=47 // pred_fallthru
          _
        // Predicated region
        $region53: #{tpu_custom_call.1} parent=47 // pred_check
          %p328 = pneg %p69
        $region54: #{tpu_custom_call.1} parent=47 // pred_check_branch
          %330 = sbr.rel (%p328) target = $region56
        $region55: #{tpu_custom_call.1} parent=47 // pred_region
          %331 = dma.done [#allocation6], 1024
        $region56: #{tpu_custom_call.1} parent=47 // pred_fallthru
          _
        // Predicated region
        $region57: #{tpu_custom_call.1} parent=47 // pred_check
          %p332 = pneg %p90
        $region58: #{tpu_custom_call.1} parent=47 // pred_check_branch
          %334 = sbr.rel (%p332) target = $region60
        $region59: #{tpu_custom_call.1} parent=47 // pred_region
          %335 = dma.done [#allocation6], 16
        $region60: #{tpu_custom_call.1} parent=47 // pred_fallthru
          _
        // Predicated region
        $region61: #{tpu_custom_call.1} parent=47 // pred_check
          %p336 = pneg %p111
        $region62: #{tpu_custom_call.1} parent=47 // pred_check_branch
          %338 = sbr.rel (%p336) target = $region64
        $region63: #{tpu_custom_call.1} parent=47 // pred_region
          %339 = dma.done [#allocation9], 1024
        $region64: #{tpu_custom_call.1} parent=47 // pred_fallthru
          _
        // Predicated region
        $region65: #{tpu_custom_call.1} parent=47 // pred_check
          %p340 = pneg %p132
        $region66: #{tpu_custom_call.1} parent=47 // pred_check_branch
          %342 = sbr.rel (%p340) target = $region68
        $region67: #{tpu_custom_call.1} parent=47 // pred_region
          %343 = dma.done [#allocation9], 16
        $region68: #{tpu_custom_call.1} parent=47 // pred_fallthru
          _
        // Predicated region
        $region69: #{tpu_custom_call.1} parent=47 // pred_check
          %p344 = pneg %p153
        $region70: #{tpu_custom_call.1} parent=47 // pred_check_branch
          %346 = sbr.rel (%p344) target = $region72
        $region71: #{tpu_custom_call.1} parent=47 // pred_region
          %347 = dma.done [#allocation12], 1024
        $region72: #{tpu_custom_call.1} parent=47 // pred_fallthru
          _
        // Predicated region
        $region73: #{tpu_custom_call.1} parent=47 // pred_check
          %p348 = pneg %p174
        $region74: #{tpu_custom_call.1} parent=47 // pred_check_branch
          %350 = sbr.rel (%p348) target = $region76
        $region75: #{tpu_custom_call.1} parent=47 // pred_region
          %351 = dma.done [#allocation12], 16
        $region76: #{tpu_custom_call.1} parent=47 // pred_fallthru
          _
        %s352 = sand.u32 %s35, 1
        %s353 = scalar_lea.sflag [#allocation3], %s352
        %s354 = sand.u32 %s35, 1
        %s355 = smul.addr %s354, 64
        %s356 = scalar_lea.vmem [#allocation2], %s355
        %p357 = pneg %p48
        %p358 = pneg %p45
        %p359 = pneg %p69
        %p360 = pneg %p66
        %p361 = pneg %p90
        %p362 = pneg %p87
        %p363 = pneg %p111
        %p364 = pneg %p108
        %p365 = pneg %p132
        %p366 = pneg %p129
        %p367 = pneg %p153
        %p368 = pneg %p150
        %p369 = pneg %p174
        %p370 = pneg %p171
        %p371 = pneg %p200
        %p372 = pneg %p197
        %s373 = sand.u32 %s187, 1
        %s374 = scalar_lea.sflag [#allocation4], %s373
        %s375 = sand.u32 %s187, 1
        %s376 = smul.addr %s375, 128
        %s377 = scalar_lea.vmem [#allocation14], %s376
        %s378 = smul.u32 16, %s27
        %s379 = smul.u32 16, %s27
        %v381 = vld [vmem:[%s323] sm:$0xf]
        %v382 = vld [vmem:[%s323 + $0x4] sm:$0xf]
        %v383 = vld [vmem:[%s323 + $0x8] sm:$0xf]
        %v384 = vld [vmem:[%s323 + $0xc] sm:$0xf]
        %v385 = vld [vmem:[%s323 + $0x10] sm:$0xf]
        %v386 = vld [vmem:[%s323 + $0x14] sm:$0xf]
        %v387 = vld [vmem:[%s323 + $0x18] sm:$0xf]
        %v388 = vld [vmem:[%s323 + $0x1c] sm:$0xf]
        %v389 = vld [vmem:[%s323 + $0x20] sm:$0xf]
        %v390 = vld [vmem:[%s323 + $0x24] sm:$0xf]
        %v391 = vld [vmem:[%s323 + $0x28] sm:$0xf]
        %v392 = vld [vmem:[%s323 + $0x2c] sm:$0xf]
        %v393 = vld [vmem:[%s323 + $0x30] sm:$0xf]
        %v394 = vld [vmem:[%s323 + $0x34] sm:$0xf]
        %v395 = vld [vmem:[%s323 + $0x38] sm:$0xf]
        %v396 = vld [vmem:[%s323 + $0x3c] sm:$0xf]
        %v397 = vld [vmem:[#allocation5] sm:$0xf]
        %v398 = vld [vmem:[#allocation5 + $0x4] sm:$0xf]
        %v399 = vld [vmem:[#allocation5 + $0x8] sm:$0xf]
        %v400 = vld [vmem:[#allocation5 + $0xc] sm:$0xf]
        %v401 = vld [vmem:[#allocation5 + $0x10] sm:$0xf]
        %v402 = vld [vmem:[#allocation5 + $0x14] sm:$0xf]
        %v403 = vld [vmem:[#allocation5 + $0x18] sm:$0xf]
        %v404 = vld [vmem:[#allocation5 + $0x1c] sm:$0xf]
        %v405 = vld [vmem:[#allocation5 + $0x20] sm:$0xf]
        %v406 = vld [vmem:[#allocation5 + $0x24] sm:$0xf]
        %v407 = vld [vmem:[#allocation5 + $0x28] sm:$0xf]
        %v408 = vld [vmem:[#allocation5 + $0x2c] sm:$0xf]
        %v409 = vld [vmem:[#allocation5 + $0x30] sm:$0xf]
        %v410 = vld [vmem:[#allocation5 + $0x34] sm:$0xf]
        %v411 = vld [vmem:[#allocation5 + $0x38] sm:$0xf]
        %v412 = vld [vmem:[#allocation5 + $0x3c] sm:$0xf]
        %v413 = vld [vmem:[#allocation7] sm:$0x1]
        %v415 = vlaneseq
        %v416 = vshrl.u32 %v415, 7
        %v417 = vsub.s32 0, %v416
        %v418 = vrot.slane %v413, %v417
        %v436 = vunpack.c.l.b16 %v381
        %v437 = vunpack.c.l.b16 %v382
        %v438 = vunpack.c.l.b16 %v383
        %v439 = vunpack.c.l.b16 %v384
        %v440 = vunpack.c.l.b16 %v385
        %v441 = vunpack.c.l.b16 %v386
        %v442 = vunpack.c.l.b16 %v387
        %v443 = vunpack.c.l.b16 %v388
        %v444 = vunpack.c.l.b16 %v389
        %v445 = vunpack.c.l.b16 %v390
        %v446 = vunpack.c.l.b16 %v391
        %v447 = vunpack.c.l.b16 %v392
        %v448 = vunpack.c.l.b16 %v393
        %v449 = vunpack.c.l.b16 %v394
        %v450 = vunpack.c.l.b16 %v395
        %v451 = vunpack.c.l.b16 %v396
        %v452 = vpack.c.b16 %v437, %v436
        %v453 = vpack.c.b16 %v439, %v438
        %v454 = vpack.c.b16 %v441, %v440
        %v455 = vpack.c.b16 %v443, %v442
        %v456 = vpack.c.b16 %v445, %v444
        %v457 = vpack.c.b16 %v447, %v446
        %v458 = vpack.c.b16 %v449, %v448
        %v459 = vpack.c.b16 %v451, %v450
        %v484 = vunpack.c.l.b16 %v397
        %v485 = vunpack.c.l.b16 %v398
        %v486 = vunpack.c.l.b16 %v399
        %v487 = vunpack.c.l.b16 %v400
        %v488 = vunpack.c.l.b16 %v401
        %v489 = vunpack.c.l.b16 %v402
        %v490 = vunpack.c.l.b16 %v403
        %v491 = vunpack.c.l.b16 %v404
        %v492 = vunpack.c.l.b16 %v405
        %v493 = vunpack.c.l.b16 %v406
        %v494 = vunpack.c.l.b16 %v407
        %v495 = vunpack.c.l.b16 %v408
        %v496 = vunpack.c.l.b16 %v409
        %v497 = vunpack.c.l.b16 %v410
        %v498 = vunpack.c.l.b16 %v411
        %v499 = vunpack.c.l.b16 %v412
        %v500 = vpack.c.b16 %v485, %v484
        %v501 = vpack.c.b16 %v487, %v486
        %v502 = vpack.c.b16 %v489, %v488
        %v503 = vpack.c.b16 %v491, %v490
        %v504 = vpack.c.b16 %v493, %v492
        %v505 = vpack.c.b16 %v495, %v494
        %v506 = vpack.c.b16 %v497, %v496
        %v507 = vpack.c.b16 %v499, %v498
        %516 = vmatprep.subr.bf16.mxu0 0
        %517 = vmatpush1.bf16.msra.mxu0 %v500
        %518 = vmatprep.subr.bf16.mxu0 0
        %519 = vmatpush1.bf16.msra.mxu0 %v501
        %520 = vmatprep.subr.bf16.mxu0 0
        %521 = vmatpush1.bf16.msra.mxu0 %v502
        %522 = vmatprep.subr.bf16.mxu0 0
        %523 = vmatpush1.bf16.msra.mxu0 %v503
        %524 = vmatprep.subr.bf16.mxu0 0
        %525 = vmatpush1.bf16.msra.mxu0 %v504
        %526 = vmatprep.subr.bf16.mxu0 0
        %527 = vmatpush1.bf16.msra.mxu0 %v505
        %528 = vmatprep.subr.bf16.mxu0 0
        %529 = vmatpush1.bf16.msra.mxu0 %v506
        %530 = vmatprep.subr.bf16.mxu0 0
        %531 = vmatpush1.bf16.msra.mxu0 %v507
        %532 = vmatprep.subr.bf16.mxu0 0
        %533 = vmatpush1.bf16.msra.mxu0 0
        %534 = vmatprep.subr.bf16.mxu0 0
        %535 = vmatpush1.bf16.msra.mxu0 0
        %536 = vmatprep.subr.bf16.mxu0 0
        %537 = vmatpush1.bf16.msra.mxu0 0
        %538 = vmatprep.subr.bf16.mxu0 0
        %539 = vmatpush1.bf16.msra.mxu0 0
        %540 = vmatprep.subr.bf16.mxu0 0
        %541 = vmatpush1.bf16.msra.mxu0 0
        %542 = vmatprep.subr.bf16.mxu0 0
        %543 = vmatpush1.bf16.msra.mxu0 0
        %544 = vmatprep.subr.bf16.mxu0 0
        %545 = vmatpush1.bf16.msra.mxu0 0
        %546 = vmatprep.subr.bf16.mxu0 0
        %547 = vmatpush1.bf16.msra.mxu0 0
        %548 = vmatprep.mubr.bf16.mxu0 0
        %549 = vmatmul.mubr.bf16.gmra.mrb[0].mxu0 %v452
        %v550 = vpop.f32.mrb[0].mxu0
        %v551 = vadd.f32 %v418, %v550
        %v552 = vpop.f32.mrb[0].mxu0
        %v553 = vpop.f32.mrb[0].mxu0
        %v554 = vadd.f32 %v418, %v553
        %v555 = vpop.f32.mrb[0].mxu0
        %556 = vmatprep.mubr.bf16.mxu0 0
        %557 = vmatmul.mubr.bf16.gmra.mrb[0].mxu0 %v453
        %v558 = vpop.f32.mrb[0].mxu0
        %v559 = vadd.f32 %v418, %v558
        %v560 = vpop.f32.mrb[0].mxu0
        %v561 = vpop.f32.mrb[0].mxu0
        %v562 = vadd.f32 %v418, %v561
        %v563 = vpop.f32.mrb[0].mxu0
        %564 = vmatprep.mubr.bf16.mxu0 0
        %565 = vmatmul.mubr.bf16.gmra.mrb[0].mxu0 %v454
        %v566 = vpop.f32.mrb[0].mxu0
        %v567 = vadd.f32 %v418, %v566
        %v568 = vpop.f32.mrb[0].mxu0
        %v569 = vpop.f32.mrb[0].mxu0
        %v570 = vadd.f32 %v418, %v569
        %v571 = vpop.f32.mrb[0].mxu0
        %572 = vmatprep.mubr.bf16.mxu0 0
        %573 = vmatmul.mubr.bf16.gmra.mrb[0].mxu0 %v455
        %v574 = vpop.f32.mrb[0].mxu0
        %v575 = vadd.f32 %v418, %v574
        %v576 = vpop.f32.mrb[0].mxu0
        %v577 = vpop.f32.mrb[0].mxu0
        %v578 = vadd.f32 %v418, %v577
        %v579 = vpop.f32.mrb[0].mxu0
        %580 = vmatprep.mubr.bf16.mxu0 0
        %581 = vmatmul.mubr.bf16.gmra.mrb[0].mxu0 %v456
        %v582 = vpop.f32.mrb[0].mxu0
        %v583 = vadd.f32 %v418, %v582
        %v584 = vpop.f32.mrb[0].mxu0
        %v585 = vpop.f32.mrb[0].mxu0
        %v586 = vadd.f32 %v418, %v585
        %v587 = vpop.f32.mrb[0].mxu0
        %588 = vmatprep.mubr.bf16.mxu0 0
        %589 = vmatmul.mubr.bf16.gmra.mrb[0].mxu0 %v457
        %v590 = vpop.f32.mrb[0].mxu0
        %v591 = vadd.f32 %v418, %v590
        %v592 = vpop.f32.mrb[0].mxu0
        %v593 = vpop.f32.mrb[0].mxu0
        %v594 = vadd.f32 %v418, %v593
        %v595 = vpop.f32.mrb[0].mxu0
        %596 = vmatprep.mubr.bf16.mxu0 0
        %597 = vmatmul.mubr.bf16.gmra.mrb[0].mxu0 %v458
        %v598 = vpop.f32.mrb[0].mxu0
        %v599 = vadd.f32 %v418, %v598
        %v600 = vpop.f32.mrb[0].mxu0
        %v601 = vpop.f32.mrb[0].mxu0
        %v602 = vadd.f32 %v418, %v601
        %v603 = vpop.f32.mrb[0].mxu0
        %604 = vmatprep.mubr.bf16.mxu0 0
        %605 = vmatmul.mubr.bf16.gmra.mrb[0].mxu0 %v459
        %v606 = vpop.f32.mrb[0].mxu0
        %v607 = vadd.f32 %v418, %v606
        %v608 = vpop.f32.mrb[0].mxu0
        %v609 = vpop.f32.mrb[0].mxu0
        %v610 = vadd.f32 %v418, %v609
        %v611 = vpop.f32.mrb[0].mxu0
        %612 = vdwg.mxu0
        %v613 = vmax.f32 %v551, 0.0
        %v614 = vmax.f32 %v554, 0.0
        %v615 = vmax.f32 %v559, 0.0
        %v616 = vmax.f32 %v562, 0.0
        %v617 = vmax.f32 %v567, 0.0
        %v618 = vmax.f32 %v570, 0.0
        %v619 = vmax.f32 %v575, 0.0
        %v620 = vmax.f32 %v578, 0.0
        %v621 = vmax.f32 %v583, 0.0
        %v622 = vmax.f32 %v586, 0.0
        %v623 = vmax.f32 %v591, 0.0
        %v624 = vmax.f32 %v594, 0.0
        %v625 = vmax.f32 %v599, 0.0
        %v626 = vmax.f32 %v602, 0.0
        %v627 = vmax.f32 %v607, 0.0
        %v628 = vmax.f32 %v610, 0.0
        %v629 = vpack.c.bf16 %v614, %v613
        %v630 = vpack.c.bf16 %v616, %v615
        %v631 = vpack.c.bf16 %v618, %v617
        %v632 = vpack.c.bf16 %v620, %v619
        %v633 = vpack.c.bf16 %v622, %v621
        %v634 = vpack.c.bf16 %v624, %v623
        %v635 = vpack.c.bf16 %v626, %v625
        %v636 = vpack.c.bf16 %v628, %v627
        %v637 = vld [vmem:[#allocation8] sm:$0xf]
        %v638 = vld [vmem:[#allocation8 + $0x4] sm:$0xf]
        %v639 = vld [vmem:[#allocation8 + $0x8] sm:$0xf]
        %v640 = vld [vmem:[#allocation8 + $0xc] sm:$0xf]
        %v641 = vld [vmem:[#allocation8 + $0x10] sm:$0xf]
        %v642 = vld [vmem:[#allocation8 + $0x14] sm:$0xf]
        %v643 = vld [vmem:[#allocation8 + $0x18] sm:$0xf]
        %v644 = vld [vmem:[#allocation8 + $0x1c] sm:$0xf]
        %v645 = vld [vmem:[#allocation8 + $0x20] sm:$0xf]
        %v646 = vld [vmem:[#allocation8 + $0x24] sm:$0xf]
        %v647 = vld [vmem:[#allocation8 + $0x28] sm:$0xf]
        %v648 = vld [vmem:[#allocation8 + $0x2c] sm:$0xf]
        %v649 = vld [vmem:[#allocation8 + $0x30] sm:$0xf]
        %v650 = vld [vmem:[#allocation8 + $0x34] sm:$0xf]
        %v651 = vld [vmem:[#allocation8 + $0x38] sm:$0xf]
        %v652 = vld [vmem:[#allocation8 + $0x3c] sm:$0xf]
        %v653 = vld [vmem:[#allocation10] sm:$0x1]
        %v655 = vlaneseq
        %v656 = vshrl.u32 %v655, 7
        %v657 = vsub.s32 0, %v656
        %v658 = vrot.slane %v653, %v657
        %v676 = vunpack.c.l.b16 %v637
        %v677 = vunpack.c.l.b16 %v638
        %v678 = vunpack.c.l.b16 %v639
        %v679 = vunpack.c.l.b16 %v640
        %v680 = vunpack.c.l.b16 %v641
        %v681 = vunpack.c.l.b16 %v642
        %v682 = vunpack.c.l.b16 %v643
        %v683 = vunpack.c.l.b16 %v644
        %v684 = vunpack.c.l.b16 %v645
        %v685 = vunpack.c.l.b16 %v646
        %v686 = vunpack.c.l.b16 %v647
        %v687 = vunpack.c.l.b16 %v648
        %v688 = vunpack.c.l.b16 %v649
        %v689 = vunpack.c.l.b16 %v650
        %v690 = vunpack.c.l.b16 %v651
        %v691 = vunpack.c.l.b16 %v652
        %v692 = vpack.c.b16 %v677, %v676
        %v693 = vpack.c.b16 %v679, %v678
        %v694 = vpack.c.b16 %v681, %v680
        %v695 = vpack.c.b16 %v683, %v682
        %v696 = vpack.c.b16 %v685, %v684
        %v697 = vpack.c.b16 %v687, %v686
        %v698 = vpack.c.b16 %v689, %v688
        %v699 = vpack.c.b16 %v691, %v690
        %708 = vmatprep.subr.bf16.mxu0 0
        %709 = vmatpush1.bf16.msra.mxu0 %v692
        %710 = vmatprep.subr.bf16.mxu0 0
        %711 = vmatpush1.bf16.msra.mxu0 %v693
        %712 = vmatprep.subr.bf16.mxu0 0
        %713 = vmatpush1.bf16.msra.mxu0 %v694
        %714 = vmatprep.subr.bf16.mxu0 0
        %715 = vmatpush1.bf16.msra.mxu0 %v695
        %716 = vmatprep.subr.bf16.mxu0 0
        %717 = vmatpush1.bf16.msra.mxu0 %v696
        %718 = vmatprep.subr.bf16.mxu0 0
        %719 = vmatpush1.bf16.msra.mxu0 %v697
        %720 = vmatprep.subr.bf16.mxu0 0
        %721 = vmatpush1.bf16.msra.mxu0 %v698
        %722 = vmatprep.subr.bf16.mxu0 0
        %723 = vmatpush1.bf16.msra.mxu0 %v699
        %724 = vmatprep.subr.bf16.mxu0 0
        %725 = vmatpush1.bf16.msra.mxu0 0
        %726 = vmatprep.subr.bf16.mxu0 0
        %727 = vmatpush1.bf16.msra.mxu0 0
        %728 = vmatprep.subr.bf16.mxu0 0
        %729 = vmatpush1.bf16.msra.mxu0 0
        %730 = vmatprep.subr.bf16.mxu0 0
        %731 = vmatpush1.bf16.msra.mxu0 0
        %732 = vmatprep.subr.bf16.mxu0 0
        %733 = vmatpush1.bf16.msra.mxu0 0
        %734 = vmatprep.subr.bf16.mxu0 0
        %735 = vmatpush1.bf16.msra.mxu0 0
        %736 = vmatprep.subr.bf16.mxu0 0
        %737 = vmatpush1.bf16.msra.mxu0 0
        %738 = vmatprep.subr.bf16.mxu0 0
        %739 = vmatpush1.bf16.msra.mxu0 0
        %740 = vmatprep.mubr.bf16.mxu0 0
        %741 = vmatmul.mubr.bf16.gmra.mrb[0].mxu0 %v629
        %v742 = vpop.f32.mrb[0].mxu0
        %v743 = vadd.f32 %v658, %v742
        %v744 = vpop.f32.mrb[0].mxu0
        %v745 = vpop.f32.mrb[0].mxu0
        %v746 = vadd.f32 %v658, %v745
        %v747 = vpop.f32.mrb[0].mxu0
        %748 = vmatprep.mubr.bf16.mxu0 0
        %749 = vmatmul.mubr.bf16.gmra.mrb[0].mxu0 %v630
        %v750 = vpop.f32.mrb[0].mxu0
        %v751 = vadd.f32 %v658, %v750
        %v752 = vpop.f32.mrb[0].mxu0
        %v753 = vpop.f32.mrb[0].mxu0
        %v754 = vadd.f32 %v658, %v753
        %v755 = vpop.f32.mrb[0].mxu0
        %756 = vmatprep.mubr.bf16.mxu0 0
        %757 = vmatmul.mubr.bf16.gmra.mrb[0].mxu0 %v631
        %v758 = vpop.f32.mrb[0].mxu0
        %v759 = vadd.f32 %v658, %v758
        %v760 = vpop.f32.mrb[0].mxu0
        %v761 = vpop.f32.mrb[0].mxu0
        %v762 = vadd.f32 %v658, %v761
        %v763 = vpop.f32.mrb[0].mxu0
        %764 = vmatprep.mubr.bf16.mxu0 0
        %765 = vmatmul.mubr.bf16.gmra.mrb[0].mxu0 %v632
        %v766 = vpop.f32.mrb[0].mxu0
        %v767 = vadd.f32 %v658, %v766
        %v768 = vpop.f32.mrb[0].mxu0
        %v769 = vpop.f32.mrb[0].mxu0
        %v770 = vadd.f32 %v658, %v769
        %v771 = vpop.f32.mrb[0].mxu0
        %772 = vmatprep.mubr.bf16.mxu0 0
        %773 = vmatmul.mubr.bf16.gmra.mrb[0].mxu0 %v633
        %v774 = vpop.f32.mrb[0].mxu0
        %v775 = vadd.f32 %v658, %v774
        %v776 = vpop.f32.mrb[0].mxu0
        %v777 = vpop.f32.mrb[0].mxu0
        %v778 = vadd.f32 %v658, %v777
        %v779 = vpop.f32.mrb[0].mxu0
        %780 = vmatprep.mubr.bf16.mxu0 0
        %781 = vmatmul.mubr.bf16.gmra.mrb[0].mxu0 %v634
        %v782 = vpop.f32.mrb[0].mxu0
        %v783 = vadd.f32 %v658, %v782
        %v784 = vpop.f32.mrb[0].mxu0
        %v785 = vpop.f32.mrb[0].mxu0
        %v786 = vadd.f32 %v658, %v785
        %v787 = vpop.f32.mrb[0].mxu0
        %788 = vmatprep.mubr.bf16.mxu0 0
        %789 = vmatmul.mubr.bf16.gmra.mrb[0].mxu0 %v635
        %v790 = vpop.f32.mrb[0].mxu0
        %v791 = vadd.f32 %v658, %v790
        %v792 = vpop.f32.mrb[0].mxu0
        %v793 = vpop.f32.mrb[0].mxu0
        %v794 = vadd.f32 %v658, %v793
        %v795 = vpop.f32.mrb[0].mxu0
        %796 = vmatprep.mubr.bf16.mxu0 0
        %797 = vmatmul.mubr.bf16.gmra.mrb[0].mxu0 %v636
        %v798 = vpop.f32.mrb[0].mxu0
        %v799 = vadd.f32 %v658, %v798
        %v800 = vpop.f32.mrb[0].mxu0
        %v801 = vpop.f32.mrb[0].mxu0
        %v802 = vadd.f32 %v658, %v801
        %v803 = vpop.f32.mrb[0].mxu0
        %804 = vdwg.mxu0
        %v805 = vmax.f32 %v743, 0.0
        %v806 = vmax.f32 %v746, 0.0
        %v807 = vmax.f32 %v751, 0.0
        %v808 = vmax.f32 %v754, 0.0
        %v809 = vmax.f32 %v759, 0.0
        %v810 = vmax.f32 %v762, 0.0
        %v811 = vmax.f32 %v767, 0.0
        %v812 = vmax.f32 %v770, 0.0
        %v813 = vmax.f32 %v775, 0.0
        %v814 = vmax.f32 %v778, 0.0
        %v815 = vmax.f32 %v783, 0.0
        %v816 = vmax.f32 %v786, 0.0
        %v817 = vmax.f32 %v791, 0.0
        %v818 = vmax.f32 %v794, 0.0
        %v819 = vmax.f32 %v799, 0.0
        %v820 = vmax.f32 %v802, 0.0
        %v821 = vpack.c.bf16 %v806, %v805
        %v822 = vpack.c.bf16 %v808, %v807
        %v823 = vpack.c.bf16 %v810, %v809
        %v824 = vpack.c.bf16 %v812, %v811
        %v825 = vpack.c.bf16 %v814, %v813
        %v826 = vpack.c.bf16 %v816, %v815
        %v827 = vpack.c.bf16 %v818, %v817
        %v828 = vpack.c.bf16 %v820, %v819
        %v829 = vld [vmem:[#allocation11] sm:$0xf]
        %v830 = vld [vmem:[#allocation11 + $0x4] sm:$0xf]
        %v831 = vld [vmem:[#allocation11 + $0x8] sm:$0xf]
        %v832 = vld [vmem:[#allocation11 + $0xc] sm:$0xf]
        %v833 = vld [vmem:[#allocation11 + $0x10] sm:$0xf]
        %v834 = vld [vmem:[#allocation11 + $0x14] sm:$0xf]
        %v835 = vld [vmem:[#allocation11 + $0x18] sm:$0xf]
        %v836 = vld [vmem:[#allocation11 + $0x1c] sm:$0xf]
        %v837 = vld [vmem:[#allocation11 + $0x20] sm:$0xf]
        %v838 = vld [vmem:[#allocation11 + $0x24] sm:$0xf]
        %v839 = vld [vmem:[#allocation11 + $0x28] sm:$0xf]
        %v840 = vld [vmem:[#allocation11 + $0x2c] sm:$0xf]
        %v841 = vld [vmem:[#allocation11 + $0x30] sm:$0xf]
        %v842 = vld [vmem:[#allocation11 + $0x34] sm:$0xf]
        %v843 = vld [vmem:[#allocation11 + $0x38] sm:$0xf]
        %v844 = vld [vmem:[#allocation11 + $0x3c] sm:$0xf]
        %v845 = vld [vmem:[#allocation13] sm:$0x1]
        %v847 = vlaneseq
        %v848 = vshrl.u32 %v847, 7
        %v849 = vsub.s32 0, %v848
        %v850 = vrot.slane %v845, %v849
        %v868 = vunpack.c.l.b16 %v829
        %v869 = vunpack.c.l.b16 %v830
        %v870 = vunpack.c.l.b16 %v831
        %v871 = vunpack.c.l.b16 %v832
        %v872 = vunpack.c.l.b16 %v833
        %v873 = vunpack.c.l.b16 %v834
        %v874 = vunpack.c.l.b16 %v835
        %v875 = vunpack.c.l.b16 %v836
        %v876 = vunpack.c.l.b16 %v837
        %v877 = vunpack.c.l.b16 %v838
        %v878 = vunpack.c.l.b16 %v839
        %v879 = vunpack.c.l.b16 %v840
        %v880 = vunpack.c.l.b16 %v841
        %v881 = vunpack.c.l.b16 %v842
        %v882 = vunpack.c.l.b16 %v843
        %v883 = vunpack.c.l.b16 %v844
        %v884 = vpack.c.b16 %v869, %v868
        %v885 = vpack.c.b16 %v871, %v870
        %v886 = vpack.c.b16 %v873, %v872
        %v887 = vpack.c.b16 %v875, %v874
        %v888 = vpack.c.b16 %v877, %v876
        %v889 = vpack.c.b16 %v879, %v878
        %v890 = vpack.c.b16 %v881, %v880
        %v891 = vpack.c.b16 %v883, %v882
        %900 = vmatprep.subr.bf16.mxu0 0
        %901 = vmatpush1.bf16.msra.mxu0 %v884
        %902 = vmatprep.subr.bf16.mxu0 0
        %903 = vmatpush1.bf16.msra.mxu0 %v885
        %904 = vmatprep.subr.bf16.mxu0 0
        %905 = vmatpush1.bf16.msra.mxu0 %v886
        %906 = vmatprep.subr.bf16.mxu0 0
        %907 = vmatpush1.bf16.msra.mxu0 %v887
        %908 = vmatprep.subr.bf16.mxu0 0
        %909 = vmatpush1.bf16.msra.mxu0 %v888
        %910 = vmatprep.subr.bf16.mxu0 0
        %911 = vmatpush1.bf16.msra.mxu0 %v889
        %912 = vmatprep.subr.bf16.mxu0 0
        %913 = vmatpush1.bf16.msra.mxu0 %v890
        %914 = vmatprep.subr.bf16.mxu0 0
        %915 = vmatpush1.bf16.msra.mxu0 %v891
        %916 = vmatprep.subr.bf16.mxu0 0
        %917 = vmatpush1.bf16.msra.mxu0 0
        %918 = vmatprep.subr.bf16.mxu0 0
        %919 = vmatpush1.bf16.msra.mxu0 0
        %920 = vmatprep.subr.bf16.mxu0 0
        %921 = vmatpush1.bf16.msra.mxu0 0
        %922 = vmatprep.subr.bf16.mxu0 0
        %923 = vmatpush1.bf16.msra.mxu0 0
        %924 = vmatprep.subr.bf16.mxu0 0
        %925 = vmatpush1.bf16.msra.mxu0 0
        %926 = vmatprep.subr.bf16.mxu0 0
        %927 = vmatpush1.bf16.msra.mxu0 0
        %928 = vmatprep.subr.bf16.mxu0 0
        %929 = vmatpush1.bf16.msra.mxu0 0
        %930 = vmatprep.subr.bf16.mxu0 0
        %931 = vmatpush1.bf16.msra.mxu0 0
        %932 = vmatprep.mubr.bf16.mxu0 0
        %933 = vmatmul.mubr.bf16.gmra.mrb[0].mxu0 %v821
        %v934 = vpop.f32.mrb[0].mxu0
        %v935 = vadd.f32 %v850, %v934
        %v936 = vpop.f32.mrb[0].mxu0
        %v937 = vpop.f32.mrb[0].mxu0
        %v938 = vadd.f32 %v850, %v937
        %v939 = vpop.f32.mrb[0].mxu0
        %940 = vmatprep.mubr.bf16.mxu0 0
        %941 = vmatmul.mubr.bf16.gmra.mrb[0].mxu0 %v822
        %v942 = vpop.f32.mrb[0].mxu0
        %v943 = vadd.f32 %v850, %v942
        %v944 = vpop.f32.mrb[0].mxu0
        %v945 = vpop.f32.mrb[0].mxu0
        %v946 = vadd.f32 %v850, %v945
        %v947 = vpop.f32.mrb[0].mxu0
        %948 = vmatprep.mubr.bf16.mxu0 0
        %949 = vmatmul.mubr.bf16.gmra.mrb[0].mxu0 %v823
        %v950 = vpop.f32.mrb[0].mxu0
        %v951 = vadd.f32 %v850, %v950
        %v952 = vpop.f32.mrb[0].mxu0
        %v953 = vpop.f32.mrb[0].mxu0
        %v954 = vadd.f32 %v850, %v953
        %v955 = vpop.f32.mrb[0].mxu0
        %956 = vmatprep.mubr.bf16.mxu0 0
        %957 = vmatmul.mubr.bf16.gmra.mrb[0].mxu0 %v824
        %v958 = vpop.f32.mrb[0].mxu0
        %v959 = vadd.f32 %v850, %v958
        %v960 = vpop.f32.mrb[0].mxu0
        %v961 = vpop.f32.mrb[0].mxu0
        %v962 = vadd.f32 %v850, %v961
        %v963 = vpop.f32.mrb[0].mxu0
        %964 = vmatprep.mubr.bf16.mxu0 0
        %965 = vmatmul.mubr.bf16.gmra.mrb[0].mxu0 %v825
        %v966 = vpop.f32.mrb[0].mxu0
        %v967 = vadd.f32 %v850, %v966
        %v968 = vpop.f32.mrb[0].mxu0
        %v969 = vpop.f32.mrb[0].mxu0
        %v970 = vadd.f32 %v850, %v969
        %v971 = vpop.f32.mrb[0].mxu0
        %972 = vmatprep.mubr.bf16.mxu0 0
        %973 = vmatmul.mubr.bf16.gmra.mrb[0].mxu0 %v826
        %v974 = vpop.f32.mrb[0].mxu0
        %v975 = vadd.f32 %v850, %v974
        %v976 = vpop.f32.mrb[0].mxu0
        %v977 = vpop.f32.mrb[0].mxu0
        %v978 = vadd.f32 %v850, %v977
        %v979 = vpop.f32.mrb[0].mxu0
        %980 = vmatprep.mubr.bf16.mxu0 0
        %981 = vmatmul.mubr.bf16.gmra.mrb[0].mxu0 %v827
        %v982 = vpop.f32.mrb[0].mxu0
        %v983 = vadd.f32 %v850, %v982
        %v984 = vpop.f32.mrb[0].mxu0
        %v985 = vpop.f32.mrb[0].mxu0
        %v986 = vadd.f32 %v850, %v985
        %v987 = vpop.f32.mrb[0].mxu0
        %988 = vmatprep.mubr.bf16.mxu0 0
        %989 = vmatmul.mubr.bf16.gmra.mrb[0].mxu0 %v828
        %v990 = vpop.f32.mrb[0].mxu0
        %v991 = vadd.f32 %v850, %v990
        %v992 = vpop.f32.mrb[0].mxu0
        %v993 = vpop.f32.mrb[0].mxu0
        %v994 = vadd.f32 %v850, %v993
        %v995 = vpop.f32.mrb[0].mxu0
        %996 = vdwg.mxu0
        %997 = vst [vmem:[%s377] sm:$0xff] %v935
        %998 = vst [vmem:[%s377 + $0x8] sm:$0xff] %v938
        %999 = vst [vmem:[%s377 + $0x10] sm:$0xff] %v943
        %1000 = vst [vmem:[%s377 + $0x18] sm:$0xff] %v946
        %1001 = vst [vmem:[%s377 + $0x20] sm:$0xff] %v951
        %1002 = vst [vmem:[%s377 + $0x28] sm:$0xff] %v954
        %1003 = vst [vmem:[%s377 + $0x30] sm:$0xff] %v959
        %1004 = vst [vmem:[%s377 + $0x38] sm:$0xff] %v962
        %1005 = vst [vmem:[%s377 + $0x40] sm:$0xff] %v967
        %1006 = vst [vmem:[%s377 + $0x48] sm:$0xff] %v970
        %1007 = vst [vmem:[%s377 + $0x50] sm:$0xff] %v975
        %1008 = vst [vmem:[%s377 + $0x58] sm:$0xff] %v978
        %1009 = vst [vmem:[%s377 + $0x60] sm:$0xff] %v983
        %1010 = vst [vmem:[%s377 + $0x68] sm:$0xff] %v986
        %1011 = vst [vmem:[%s377 + $0x70] sm:$0xff] %v991
        %1012 = vst [vmem:[%s377 + $0x78] sm:$0xff] %v994
        %s1013 = sand.u32 %s187, 1
        %s1014 = scalar_lea.sflag [#allocation4], %s1013
        %s1015 = sand.u32 %s187, 1
        %s1016 = smul.addr %s1015, 128
        %s1017 = scalar_lea.vmem [#allocation14], %s1016
        // Predicated region
        $region77: #{tpu_custom_call.1} parent=47 // pred_check
          %p1018 = pneg %p197
        $region78: #{tpu_custom_call.1} parent=47 // pred_check_branch
          %1020 = sbr.rel (%p1018) target = $region80
        $region79: #{tpu_custom_call.1} parent=47 // pred_region
          %s1021 = smul.u32 16, %s27
          %s1023 = ssub.s32 2048, 2048
          %1024 = vsyncadd %s1014, %s1023
          %s1025 = smul.addr %s1021, 128
          %s1026 = scalar_lea.hbm %s7, %s1025
          %s1027 = sshll.u32 %s1017, 4
          %s1028 = int_to_ptr.vmem [resolvable:$true] %s1027
          %1033 = dma.vmem_to_hbm [thread:$0]  %s1028, 2048, %s1026, %s1014, 128, 128, 8
        $region80: #{tpu_custom_call.1} parent=47 // pred_fallthru
          _
      $region48: #{tpu_custom_call.1} parent=5 // pred_fallthru
        _
      %p1034 = scmp.le.s32.totalorder 2, %s22
      // Predicated region
      $region81: #{tpu_custom_call.1} parent=5 // pred_check
        %p1035 = pneg %p1034
      $region82: #{tpu_custom_call.1} parent=5 // pred_check_branch
        %1037 = sbr.rel (%p1035) target = $region84
      $region83: #{tpu_custom_call.1} parent=5 // pred_region
        %s1038 = ssub.s32 %s22, 2
        // Predicated region
        $region85: #{tpu_custom_call.1} parent=83 // pred_check
          %p1039 = pneg %p203
        $region86: #{tpu_custom_call.1} parent=83 // pred_check_branch
          %1041 = sbr.rel (%p1039) target = $region88
        $region87: #{tpu_custom_call.1} parent=83 // pred_region
          %s1042 = sand.u32 %s188, 1
          %s1043 = scalar_lea.sflag [#allocation4], %s1042
          %s1044 = sand.u32 %s188, 1
          %s1045 = smul.addr %s1044, 128
          %s1046 = scalar_lea.vmem [#allocation14], %s1045
          %1047 = dma.done %s1043, 2048
        $region88: #{tpu_custom_call.1} parent=83 // pred_fallthru
          _
      $region84: #{tpu_custom_call.1} parent=5 // pred_fallthru
        _
    $region6: #{tpu_custom_call.1} parent=1 // loop_footer
      %s26 = sadd.s32 1, %s22
    $region7: #{tpu_custom_call.1} parent=1 // loop_footer_branch
      %21 = sbr.rel target = $region3
    $region8: #{tpu_custom_call.1} parent=1 // loop_exit
      _
    %1048 = vsyncpa [#allocation3], 1
    %s1049 = scalar_lea.sflag [#allocation3], 1
    %1050 = vsyncpa %s1049, 1
    %1051 = vsyncpa [#allocation6], 1
    %1052 = vsyncpa [#allocation9], 1
    %1053 = vsyncpa [#allocation12], 1
    %1054 = vsyncpa [#allocation4], 1
    %s1055 = scalar_lea.sflag [#allocation4], 1
    %1056 = vsyncpa %s1055, 1

</llo_original>
